<compile_context>
chip_gen: v7x
topology: tpu7x:2x2x1
jax: 0.10.0
libtpu: 0.0.40
codegen_flags: <defaults>
</compile_context>

<pallas_src>
import jax
import jax.numpy as jnp
from jax.experimental import pallas as pl
from jax.experimental.pallas import tpu as pltpu


def _schnet_fused_kernel(x_ref, w1_ref, b1_ref, u_ref, cb_ref, out_ref):
    # x_ref:  (R, H)    node features, batch folded into rows (R = bt * N), compute dtype
    # w1_ref: (H, H)    first MLP weight, pre-transposed so we compute x @ W1^T, compute dtype
    # b1_ref: (1, H)    first MLP bias, f32
    # u_ref:  (N, H)    U = (M^T @ wf2d) @ W2  (graph structure + fc + 2nd layer folded), f32
    # cb_ref: (1,)      scalar c + bf in SMEM (2nd-layer bias + fc bias, pre-reduced)
    # out_ref:(1,1,bt)  per-graph scalars for this tile (single lane-dense store)
    r, hdim = x_ref.shape
    n = u_ref.shape[0]
    bt = r // n
    # single MXU pass
    h = jnp.dot(x_ref[...], w1_ref[...], preferred_element_type=jnp.float32)
    h = jnp.maximum(h + b1_ref[...], 0.0)                  # bias + ReLU, f32 on the VPU
    # y_b = sum_{s,k} h_b[s,k] * U[s,k]   (leading-dim split is layout-free for N % 8 == 0)
    prod = h.reshape(bt, n, hdim) * u_ref[...]             # broadcast U over graphs (VPU)
    per_node = jnp.sum(prod, axis=-1)                      # (bt, n)   lane reduce (XLU)
    y = jnp.sum(per_node, axis=-1) + cb_ref[0]             # (bt,)
    out_ref[...] = y.reshape(1, 1, bt)


def _pick_tile(batch, n, h, itemsize):
    """Pick graphs-per-tile (bt) and tile count from a conservative VMEM budget."""
    lane_h = -(-h // 128) * 128
    row_bytes = lane_h * 4                     # f32 intermediates dominate (lane padded)
    # ~4 live R-row buffers (x double-buffer + h + prod); keep them under ~8 MiB
    budget_rows = max(n, (8 << 20) // (row_bytes * 4))
    target_rows = min(4096, budget_rows)
    bt = max(1, min(batch, target_rows // max(n, 1)))
    # whole batch fits in one tile but there is real work -> split in two so the
    # "parallel" grid axis can shard across v7x's two TensorCores
    if bt >= batch and batch > 1 and batch * n >= 2048:
        bt = -(-batch // 2)
    sub = 16 if itemsize == 2 else 8
    num_tiles = -(-batch // bt)
    if num_tiles > 1:
        while (bt * n) % sub != 0:             # sublane-align multi-tile row blocks
            bt += 1
        num_tiles = -(-batch // bt)
    return bt, num_tiles


def schnet_forward(x, edge_index, pos, params, *, compute_dtype=jnp.float32):
    B, N, H = x.shape
    src = edge_index[0]
    tgt = edge_index[1]

    # TODO(synk): the reference computes edge_attr = cdist(pos[src], pos[tgt]) but
    # message() never uses it, so it is omitted (no effect on the output).
    del pos

    f32 = jnp.float32

    # ---- host-side algebraic fold (batch independent, plain JAX) ----------
    src_onehot = (src[:, None] == jnp.arange(N)[None, :]).astype(f32)     # (E, N)
    tgt_onehot = (tgt[None, :] == jnp.arange(N)[:, None]).astype(f32)     # (N, E)
    deg = tgt_onehot.sum(axis=1, keepdims=True)
    agg_mat = tgt_onehot / jnp.maximum(deg, 1.0)                          # (N, E) mean-aggr
    M = agg_mat @ src_onehot                                              # (N, N)
    wf2d = params["wf"].reshape(N, H).astype(f32)
    V = M.T @ wf2d                                                        # (N, H)
    U = V @ params["w2"].astype(f32)                                      # (N, H): W2 folded
    cb = (jnp.sum(V @ params["b2"].astype(f32))
          + params["bf"].reshape(()).astype(f32)).reshape(1)              # (1,) b2 + fc bias

    w1_t = params["w1"].T.astype(compute_dtype)                           # (H, H)
    b1 = params["b1"].reshape(1, H).astype(f32)

    # ---- tiling: fold batch into the matmul M dimension --------------------
    itemsize = jnp.dtype(compute_dtype).itemsize
    bt, num_tiles = _pick_tile(B, N, H, itemsize)
    B_pad = num_tiles * bt
    R = bt * N

    x2d = x.reshape(B * N, H)
    if B_pad > B:                                                         # zero-pad graphs
        x2d = jnp.concatenate(
            [x2d, jnp.zeros(((B_pad - B) * N, H), x2d.dtype)], axis=0)
    x2d = x2d.astype(compute_dtype)

    bytes_accessed = int(B_pad * N * H * itemsize                         # x
                         + H * H * itemsize                               # W1
                         + (N * H + H + 1) * 4                            # U, b1, cb
                         + B_pad * 4)                                     # output
    cost = pl.CostEstimate(flops=2 * B_pad * N * H * H + 4 * B_pad * N * H,
                           transcendentals=0,
                           bytes_accessed=bytes_accessed)

    out = pl.pallas_call(
        _schnet_fused_kernel,
        out_shape=jax.ShapeDtypeStruct((num_tiles, 1, bt), jnp.float32),
        grid_spec=pltpu.PrefetchScalarGridSpec(
            num_scalar_prefetch=0,
            grid=(num_tiles,),
            in_specs=[
                pl.BlockSpec((R, H), lambda i: (i, 0)),    # node-feature row tile
                pl.BlockSpec((H, H), lambda i: (0, 0)),    # W1^T (constant)
                pl.BlockSpec((1, H), lambda i: (0, 0)),    # b1   (constant)
                pl.BlockSpec((N, H), lambda i: (0, 0)),    # U    (constant, not tiled)
                pl.BlockSpec(memory_space=pltpu.MemorySpace.SMEM),  # scalar c + bf
            ],
            out_specs=pl.BlockSpec((1, 1, bt), lambda i: (i, 0, 0)),  # lane-dense row
        ),
        compiler_params=pltpu.CompilerParams(
            dimension_semantics=("parallel",)),
        cost_estimate=cost,
    )(x2d, w1_t, b1, U, cb)

    return out.reshape(B_pad)[:B].reshape(B, 1)


def schnet_ref(x, edge_index, params):
    """Pure-JAX reference of the PyTorch forward (edge-based, for verification)."""
    B, N, H = x.shape
    src, tgt = edge_index[0], edge_index[1]
    x_j = x[:, src, :]
    h = jnp.maximum(x_j @ params["w1"].T + params["b1"], 0.0)
    msg = h @ params["w2"].T + params["b2"]
    onehot = (tgt[None, :] == jnp.arange(N)[:, None]).astype(jnp.float32)
    deg = onehot.sum(axis=1, keepdims=True)
    A = onehot / jnp.maximum(deg, 1.0)
    agg = jnp.einsum("ne,beh->bnh", A, msg)
    flat = agg.reshape(B, -1)
    return flat @ params["wf"].T + params["bf"]


if __name__ == "__main__":
    B = 2                 # batch of graphs
    N = 8                 # num_amino_acids (nodes per graph)
    H = 32                # hidden_channels
    E = 16                # number of edges

    key = jax.random.PRNGKey(0)
    k_x, k_ei, k_pos, k_w1, k_b1, k_w2, k_b2, k_wf, k_bf = jax.random.split(key, 9)

    x = jax.random.normal(k_x, (B, N, H), dtype=jnp.float32)
    edge_index = jax.random.randint(k_ei, (2, E), 0, N, dtype=jnp.int32)
    pos = jax.random.normal(k_pos, (N, 3), dtype=jnp.float32)

    params = {
        "w1": 0.1 * jax.random.normal(k_w1, (H, H), dtype=jnp.float32),  # Linear(H,H).weight
        "b1": 0.1 * jax.random.normal(k_b1, (H,), dtype=jnp.float32),
        "w2": 0.1 * jax.random.normal(k_w2, (H, H), dtype=jnp.float32),
        "b2": 0.1 * jax.random.normal(k_b2, (H,), dtype=jnp.float32),
        "wf": 0.1 * jax.random.normal(k_wf, (1, N * H), dtype=jnp.float32),  # Linear(N*H,1).weight
        "bf": 0.1 * jax.random.normal(k_bf, (1,), dtype=jnp.float32),
    }

    ref = schnet_ref(x, edge_index, params)

    # f32 path: strict check (only FP accumulation order differs from the reference).
    out = jax.block_until_ready(schnet_forward(x, edge_index, pos, params))
    assert out.shape == (B, 1), out.shape
    assert jnp.allclose(out, ref, atol=1e-4, rtol=1e-4), (out, ref)

    # bf16 MXU-operand path (x, W1 in bf16; all VPU work stays f32): loose check.
    out_bf16 = jax.block_until_ready(
        schnet_forward(x, edge_index, pos, params, compute_dtype=jnp.bfloat16))
    assert out_bf16.shape == (B, 1), out_bf16.shape
    assert jnp.allclose(out_bf16, ref, atol=5e-2, rtol=5e-2), (out_bf16, ref)

    print("KERNEL_OK")
</pallas_src>

<mosaic_0001>
module attributes {stable_mosaic.version = 11 : i64} {
  func.func @_schnet_fused_kernel(%arg0: i32, %arg1: memref<16x32xf32, #tpu.memory_space<vmem>>, %arg2: memref<32x32xf32, #tpu.memory_space<vmem>>, %arg3: memref<1x32xf32, #tpu.memory_space<vmem>>, %arg4: memref<8x32xf32, #tpu.memory_space<vmem>>, %arg5: memref<1xf32, #tpu.memory_space<smem>>, %arg6: memref<1x1x2xf32, #tpu.memory_space<vmem>>) attributes {dimension_semantics = [#tpu.dimension_semantics<parallel>], iteration_bounds = array<i64: 1>, scalar_prefetch = 0 : i64, scratch_operands = 0 : i64, tpu.core_type = #tpu.core_type<tc>, window_params = [{transform_indices = @transform_0, window_bounds = array<i64: 16, 32>}, {pipeline_mode = #tpu.pipeline_mode<synchronous>, transform_indices = @transform_1, window_bounds = array<i64: 32, 32>}, {pipeline_mode = #tpu.pipeline_mode<synchronous>, transform_indices = @transform_2, window_bounds = array<i64: 1, 32>}, {pipeline_mode = #tpu.pipeline_mode<synchronous>, transform_indices = @transform_3, window_bounds = array<i64: 8, 32>}, {transform_indices = @transform_4, window_bounds = array<i64: 1>}, {transform_indices = @transform_5, window_bounds = array<i64: 1, 1, 2>}]} {
    %c0 = arith.constant 0 : index
    %c0_0 = arith.constant 0 : index
    %0 = vector.load %arg1[%c0, %c0_0] : memref<16x32xf32, #tpu.memory_space<vmem>>, vector<16x32xf32>
    %c0_1 = arith.constant 0 : index
    %c0_2 = arith.constant 0 : index
    %1 = vector.load %arg2[%c0_1, %c0_2] : memref<32x32xf32, #tpu.memory_space<vmem>>, vector<32x32xf32>
    %cst = arith.constant dense<0.000000e+00> : vector<16x32xf32>
    %2 = tpu.matmul %0, %1, %cst {dimension_numbers = #tpu.dot_dimension_numbers<[1], [0], [0], [1], [0, 0, 1, 1], [], []>} : vector<16x32xf32>, vector<32x32xf32>, vector<16x32xf32> -> vector<16x32xf32>
    %c0_3 = arith.constant 0 : index
    %c0_4 = arith.constant 0 : index
    %3 = vector.load %arg3[%c0_3, %c0_4] : memref<1x32xf32, #tpu.memory_space<vmem>>, vector<1x32xf32>
    %4 = vector.broadcast %3 : vector<1x32xf32> to vector<16x32xf32>
    %5 = arith.addf %2, %4 : vector<16x32xf32>
    %cst_5 = arith.constant 0.000000e+00 : f32
    %6 = vector.broadcast %cst_5 : f32 to vector<16x32xf32>
    %7 = arith.maximumf %5, %6 : vector<16x32xf32>
    %8 = vector.shape_cast %7 : vector<16x32xf32> to vector<2x8x32xf32>
    %c0_6 = arith.constant 0 : index
    %c0_7 = arith.constant 0 : index
    %9 = vector.load %arg4[%c0_6, %c0_7] : memref<8x32xf32, #tpu.memory_space<vmem>>, vector<8x32xf32>
    %10 = vector.shape_cast %9 : vector<8x32xf32> to vector<1x8x32xf32>
    %11 = vector.broadcast %10 : vector<1x8x32xf32> to vector<2x8x32xf32>
    %12 = arith.mulf %8, %11 : vector<2x8x32xf32>
    %cst_8 = arith.constant dense<0.000000e+00> : vector<2x8xf32>
    %13 = vector.multi_reduction <add>, %12, %cst_8 [2] : vector<2x8x32xf32> to vector<2x8xf32>
    %cst_9 = arith.constant dense<0.000000e+00> : vector<2xf32>
    %14 = vector.multi_reduction <add>, %13, %cst_9 [1] : vector<2x8xf32> to vector<2xf32>
    %c0_10 = arith.constant 0 : index
    %15 = memref.load %arg5[%c0_10] : memref<1xf32, #tpu.memory_space<smem>>
    %16 = vector.broadcast %15 : f32 to vector<2xf32>
    %17 = arith.addf %14, %16 : vector<2xf32>
    %18 = vector.shape_cast %17 : vector<2xf32> to vector<1x1x2xf32>
    %c0_11 = arith.constant 0 : index
    %c0_12 = arith.constant 0 : index
    %c0_13 = arith.constant 0 : index
    %19 = vector.load %arg6[%c0_11, %c0_12, %c0_13] : memref<1x1x2xf32, #tpu.memory_space<vmem>>, vector<1x1x2xf32>
    tpu.vector_store %arg6[%c0_11, %c0_12, %c0_13], %18 {strides = array<i32>} : memref<1x1x2xf32, #tpu.memory_space<vmem>>, vector<1x1x2xf32>,
    return
  }
  func.func @transform_0(%arg0: i32) -> (i32, i32) {
    %c0_i32 = arith.constant 0 : i32
    %c0_i32_0 = arith.constant 0 : i32
    return %arg0, %c0_i32 : i32, i32
  }
  func.func @transform_1(%arg0: i32) -> (i32, i32) {
    %c0_i32 = arith.constant 0 : i32
    %c0_i32_0 = arith.constant 0 : i32
    %c0_i32_1 = arith.constant 0 : i32
    return %c0_i32, %c0_i32_0 : i32, i32
  }
  func.func @transform_2(%arg0: i32) -> (i32, i32) {
    %c0_i32 = arith.constant 0 : i32
    %c0_i32_0 = arith.constant 0 : i32
    %c0_i32_1 = arith.constant 0 : i32
    return %c0_i32, %c0_i32_0 : i32, i32
  }
  func.func @transform_3(%arg0: i32) -> (i32, i32) {
    %c0_i32 = arith.constant 0 : i32
    %c0_i32_0 = arith.constant 0 : i32
    %c0_i32_1 = arith.constant 0 : i32
    return %c0_i32, %c0_i32_0 : i32, i32
  }
  func.func @transform_4(%arg0: i32) -> i32 {
    %c0_i32 = arith.constant 0 : i32
    %c0_i32_0 = arith.constant 0 : i32
    return %c0_i32 : i32
  }
  func.func @transform_5(%arg0: i32) -> (i32, i32, i32) {
    %c0_i32 = arith.constant 0 : i32
    %c0_i32_0 = arith.constant 0 : i32
    %c0_i32_1 = arith.constant 0 : i32
    return %arg0, %c0_i32, %c0_i32_0 : i32, i32, i32
  }
}

</mosaic_0001>

<llo_original>
// kernel: tpu_custom_call.1
$region0: #{tpu_custom_call.1}
  #allocation0 [shape = 'u32[]', space=smem, size = 0x4, offset = 0x4, fixed_abs, tag = 'smem constant byte address 0x4 - core index']
  #allocation1 [shape = 'u32[144,128]{1,0:T(1,128)}', space=vmem, size = 0x12000, scoped, tag = 'internal scratch']
  #allocation2 [shape = 'f32[1]{0:T(128)S(6)}', space=smem, size = 0x200, scoped, tag = 'scoped memory for tpu_custom_call.1']
  %s0 = inlined_call_operand.hbm [shape: f32[16,32], index: 0, kind: input, shape index: {}]
  %s1 = inlined_call_operand.hbm [shape: f32[32,32], index: 1, kind: input, shape index: {}]
  %s2 = inlined_call_operand.vmem [shape: f32[1,32], index: 2, kind: input, shape index: {}]
  %s3 = inlined_call_operand.vmem [shape: f32[8,32], index: 3, kind: input, shape index: {}]
  %s4 = inlined_call_operand.<no memory space> [shape: f32[1], index: 4, kind: input, shape index: {}]
  %s5 = inlined_call_operand.hbm [shape: f32[1,1,2], index: 5, kind: output, shape index: {}]
  %s6 = sld [smem:[#allocation0]]
  $region38: #{tpu_custom_call.1} parent=0
    _
  %s8 = ssub.s32 1, %s6
  %s9 = scalar_select 0, %s8, %s6
  %10 = sst [smem:[#allocation2]] %s4
  $region1: #{tpu_custom_call.1} parent=0
    #allocation3 [shape = 'u8[8192]{0}', space=vmem, size = 0x2000, scoped, tag = 'input window, operand 0, single buffered']
    #allocation4 [shape = 's32[1]{0}', space=sflag, size = 0x4, scoped, tag = 'scoped memory for tpu_custom_call.1']
    #allocation5 [shape = 's32[1]{0}', space=sflag, size = 0x4, scoped, tag = 'scoped memory for tpu_custom_call.1']
    #allocation6 [shape = 'u8[16384]{0}', space=vmem, size = 0x4000, scoped, tag = 'input window, operand 1, single buffered']
    #allocation7 [shape = 's32[1]{0}', space=sflag, size = 0x4, scoped, tag = 'scoped memory for tpu_custom_call.1']
    #allocation8 [shape = 'u8[512]{0}', space=vmem, size = 0x400, scoped, tag = 'output window, operand 0, single buffered']
    %11 = vsyncpa [#allocation4], 0
    %12 = vsyncpa [#allocation7], 0
    %13 = vsyncpa [#allocation5], 0
    // Predicated region
    $region2: #{tpu_custom_call.1} parent=1 // pred_check
      _
    $region3: #{tpu_custom_call.1} parent=1 // pred_check_branch
      %15 = sbr.rel (0) target = $region5
    $region4: #{tpu_custom_call.1} parent=1 // pred_region
      %s17 = ssub.s32 256, 256
      %18 = vsyncadd [#allocation4], %s17
      %s19 = sshll.u32 [#allocation3], 4
      %s20 = int_to_ptr.vmem [resolvable:$true] %s19
      %25 = dma.hbm_to_vmem [thread:$0]  %s0, 256, %s20, [#allocation4], 128, 128, 8
    $region5: #{tpu_custom_call.1} parent=1 // pred_fallthru
      _
    // Predicated region
    $region6: #{tpu_custom_call.1} parent=1 // pred_check
      _
    $region7: #{tpu_custom_call.1} parent=1 // pred_check_branch
      %27 = sbr.rel (0) target = $region9
    $region8: #{tpu_custom_call.1} parent=1 // pred_region
      %s29 = ssub.s32 512, 512
      %30 = vsyncadd [#allocation7], %s29
      %s31 = sshll.u32 [#allocation6], 4
      %s32 = int_to_ptr.vmem [resolvable:$true] %s31
      %37 = dma.hbm_to_vmem [thread:$0]  %s1, 512, %s32, [#allocation7], 128, 128, 8
    $region9: #{tpu_custom_call.1} parent=1 // pred_fallthru
      _
    // Predicated region
    $region10: #{tpu_custom_call.1} parent=1 // pred_check
      _
    $region11: #{tpu_custom_call.1} parent=1 // pred_check_branch
      %39 = sbr.rel (0) target = $region13
    $region12: #{tpu_custom_call.1} parent=1 // pred_region
      _
    $region13: #{tpu_custom_call.1} parent=1 // pred_fallthru
      _
    // Predicated region
    $region14: #{tpu_custom_call.1} parent=1 // pred_check
      _
    $region15: #{tpu_custom_call.1} parent=1 // pred_check_branch
      %41 = sbr.rel (0) target = $region17
    $region16: #{tpu_custom_call.1} parent=1 // pred_region
      _
    $region17: #{tpu_custom_call.1} parent=1 // pred_fallthru
      _
    // Predicated region
    $region18: #{tpu_custom_call.1} parent=1 // pred_check
      _
    $region19: #{tpu_custom_call.1} parent=1 // pred_check_branch
      %43 = sbr.rel (0) target = $region21
    $region20: #{tpu_custom_call.1} parent=1 // pred_region
      _
    $region21: #{tpu_custom_call.1} parent=1 // pred_fallthru
      _
    // Predicated region
    $region22: #{tpu_custom_call.1} parent=1 // pred_check
      _
    $region23: #{tpu_custom_call.1} parent=1 // pred_check_branch
      %45 = sbr.rel (0) target = $region25
    $region24: #{tpu_custom_call.1} parent=1 // pred_region
      %46 = dma.done [#allocation4], 256
    $region25: #{tpu_custom_call.1} parent=1 // pred_fallthru
      _
    // Predicated region
    $region26: #{tpu_custom_call.1} parent=1 // pred_check
      _
    $region27: #{tpu_custom_call.1} parent=1 // pred_check_branch
      %48 = sbr.rel (0) target = $region29
    $region28: #{tpu_custom_call.1} parent=1 // pred_region
      %49 = dma.done [#allocation7], 512
    $region29: #{tpu_custom_call.1} parent=1 // pred_fallthru
      _
    %v50 = vld [vmem:[#allocation3] sm:$0xff]
    %v51 = vld [vmem:[#allocation3 + $0x8] sm:$0xff]
    %v52 = vld [vmem:[#allocation6] sm:$0xff]
    %v53 = vld [vmem:[#allocation6 + $0x8] sm:$0xff]
    %v54 = vld [vmem:[#allocation6 + $0x10] sm:$0xff]
    %v55 = vld [vmem:[#allocation6 + $0x18] sm:$0xff]
    %v56 = vld [vmem:[%s2] sm:$0x1]
    %v58 = vlaneseq
    %v59 = vshrl.u32 %v58, 7
    %v60 = vsub.s32 0, %v59
    %v61 = vrot.slane %v56, %v60
    %vm63 = vcmask 261120
    %v65 = vsel %vm63, %v50, 0
    %v68 = vsel %vm63, %v51, 0
    %70 = vmatprep.subr.mxu0 0.0
    %71 = vmatpush1.msra.mxu0 %v52
    %72 = vmatprep.subr.mxu0 0.0
    %73 = vmatpush1.msra.mxu0 %v53
    %74 = vmatprep.subr.mxu0 0.0
    %75 = vmatpush1.msra.mxu0 %v54
    %76 = vmatprep.subr.mxu0 0.0
    %77 = vmatpush1.msra.mxu0 %v55
    %78 = vmatprep.subr.mxu0 0.0
    %79 = vmatpush1.msra.mxu0 0.0
    %80 = vmatprep.subr.mxu0 0.0
    %81 = vmatpush1.msra.mxu0 0.0
    %82 = vmatprep.subr.mxu0 0.0
    %83 = vmatpush1.msra.mxu0 0.0
    %84 = vmatprep.subr.mxu0 0.0
    %85 = vmatpush1.msra.mxu0 0.0
    %86 = vmatprep.subr.mxu0 0.0
    %87 = vmatpush1.msra.mxu0 0.0
    %88 = vmatprep.subr.mxu0 0.0
    %89 = vmatpush1.msra.mxu0 0.0
    %90 = vmatprep.subr.mxu0 0.0
    %91 = vmatpush1.msra.mxu0 0.0
    %92 = vmatprep.subr.mxu0 0.0
    %93 = vmatpush1.msra.mxu0 0.0
    %94 = vmatprep.subr.mxu0 0.0
    %95 = vmatpush1.msra.mxu0 0.0
    %96 = vmatprep.subr.mxu0 0.0
    %97 = vmatpush1.msra.mxu0 0.0
    %98 = vmatprep.subr.mxu0 0.0
    %99 = vmatpush1.msra.mxu0 0.0
    %100 = vmatprep.subr.mxu0 0.0
    %101 = vmatpush1.msra.mxu0 0.0
    %102 = vmatprep.subr.mxu0 0.0
    %103 = vmatpush1.msra.mxu0 0.0
    %104 = vmatprep.subr.mxu0 0.0
    %105 = vmatpush1.msra.mxu0 0.0
    %106 = vmatprep.subr.mxu0 0.0
    %107 = vmatpush1.msra.mxu0 0.0
    %108 = vmatprep.subr.mxu0 0.0
    %109 = vmatpush1.msra.mxu0 0.0
    %110 = vmatprep.subr.mxu0 0.0
    %111 = vmatpush1.msra.mxu0 0.0
    %112 = vmatprep.subr.mxu0 0.0
    %113 = vmatpush1.msra.mxu0 0.0
    %114 = vmatprep.subr.mxu0 0.0
    %115 = vmatpush1.msra.mxu0 0.0
    %116 = vmatprep.subr.mxu0 0.0
    %117 = vmatpush1.msra.mxu0 0.0
    %118 = vmatprep.subr.mxu0 0.0
    %119 = vmatpush1.msra.mxu0 0.0
    %120 = vmatprep.subr.mxu0 0.0
    %121 = vmatpush1.msra.mxu0 0.0
    %122 = vmatprep.subr.mxu0 0.0
    %123 = vmatpush1.msra.mxu0 0.0
    %124 = vmatprep.subr.mxu0 0.0
    %125 = vmatpush1.msra.mxu0 0.0
    %126 = vmatprep.subr.mxu0 0.0
    %127 = vmatpush1.msra.mxu0 0.0
    %128 = vmatprep.subr.mxu0 0.0
    %129 = vmatpush1.msra.mxu0 0.0
    %130 = vmatprep.subr.mxu0 0.0
    %131 = vmatpush1.msra.mxu0 0.0
    %132 = vmatprep.subr.mxu0 0.0
    %133 = vmatpush1.msra.mxu0 0.0
    %134 = vmatprep.mubr.f32.mxu0 0.0
    %135 = vmatmul.mubr.f32.gmra.mrb[0].mxu0 %v65
    %v136 = vpop.f32.mrb[0].mxu0
    %v137 = vadd.f32 %v61, %v136
    %v138 = vpop.f32.mrb[0].mxu0
    %139 = vmatprep.mubr.f32.mxu0 0.0
    %140 = vmatmul.mubr.f32.gmra.mrb[0].mxu0 %v68
    %v141 = vpop.f32.mrb[0].mxu0
    %v142 = vadd.f32 %v61, %v141
    %v143 = vpop.f32.mrb[0].mxu0
    %144 = vdwg.mxu0
    %v145 = vmax.f32 %v137, 0.0
    %v146 = vmax.f32 %v142, 0.0
    %v147 = vld [vmem:[%s3] sm:$0xff]
    %v148 = vmul.f32 %v145, %v147
    %v149 = vmul.f32 %v146, %v147
    %v150 = vsel %vm63, %v148, 0.0
    %151 = vadd.xlane.f32.xlu0 %v150
    %v152 = vpop.xlane.xlu0 %151
    %v153 = vsel %vm63, %v149, 0.0
    %154 = vadd.xlane.f32.xlu0 %v153
    %v155 = vpop.xlane.xlu0 %154
    %v158 = vlaneseq
    %v159 = vand.u32 %v158, 127
    %v160 = vlaneseq
    %v161 = vshrl.u32 %v160, 7
    %v162 = vsub.s32 %v159, %v161
    %v163 = vrot.slane %v152, %v162
    %v164 = vlaneseq
    %v165 = vshrl.u32 %v164, 7
    %v166 = vsub.s32 %v159, %v165
    %v167 = vrot.slane %v155, %v166
    %vm168 = vcmask 1041409
    %v169 = vsel %vm168, %v167, %v163
    %vm171 = vcmask 58368
    %v172 = vsel %vm171, %v169, 0.0
    %173 = vadd.xlane.f32.xlu0 %v172
    %v174 = vpop.xlane.xlu0 %173
    %s175 = sld [smem:[#allocation2]]
    %v176 = vstv %s175
    %v177 = vadd.f32 %v174, %v176
    %v179 = vlaneseq
    %v180 = vshrl.u32 %v179, 7
    %v181 = vsub.s32 %v159, %v180
    %v182 = vrot.slane %v177, %v181
    %vm184 = vcmask 8192
    %185 = vst.msk [vmem:[#allocation8] sm:$0x1] %vm184, %v182
    // Predicated region
    $region30: #{tpu_custom_call.1} parent=1 // pred_check
      _
    $region31: #{tpu_custom_call.1} parent=1 // pred_check_branch
      %187 = sbr.rel (0) target = $region33
    $region32: #{tpu_custom_call.1} parent=1 // pred_region
      %s189 = ssub.s32 16, 16
      %190 = vsyncadd [#allocation5], %s189
      %s192 = sshll.u32 [#allocation8], 4
      %s193 = int_to_ptr.vmem [resolvable:$true] %s192
      %195 = dma.vmem_to_hbm [thread:$0]  %s193, 16, %s5, [#allocation5]
    $region33: #{tpu_custom_call.1} parent=1 // pred_fallthru
      _
    // Predicated region
    $region34: #{tpu_custom_call.1} parent=1 // pred_check
      _
    $region35: #{tpu_custom_call.1} parent=1 // pred_check_branch
      %197 = sbr.rel (0) target = $region37
    $region36: #{tpu_custom_call.1} parent=1 // pred_region
      %198 = dma.done [#allocation5], 16
    $region37: #{tpu_custom_call.1} parent=1 // pred_fallthru
      _
    %199 = vsyncpa [#allocation4], 1
    %200 = vsyncpa [#allocation7], 1
    %201 = vsyncpa [#allocation5], 1

</llo_original>
